<compile_context>
chip_gen: v6e
topology: v6e:2x2x1
jax: 0.10.0
libtpu: 0.0.40
codegen_flags: <defaults>
</compile_context>

<pallas_src>
import functools

import jax
import jax.numpy as jnp
from jax.experimental import pallas as pl
from jax.experimental.pallas import tpu as pltpu


def _round_up(x, m):
    return (x + m - 1) // m * m


def _default_n_splits():
    # 2-way pixel split only buys parallelism on 2-TensorCore chips (v7x).
    try:
        kind = jax.devices()[0].device_kind.lower()
    except Exception:
        return 1
    return 2 if ("v7" in kind or "7x" in kind) else 1


def _pick_tile_pixels(c, hw_per_split, logits_itemsize, requested=None,
                      vmem_budget_bytes=24 << 20):
    """Largest lane tile (multiple of 128) that fits a conservative VMEM budget."""
    per_pixel_bytes = (
        2 * (2 * c + 1) * 4        # resident f32 output accumulators (2x safety margin)
        + 2 * c * logits_itemsize  # double-buffered logits input block
        + 2 * 4                    # double-buffered int32 labels block
    )
    cap = max(128, vmem_budget_bytes // per_pixel_bytes)
    target = 65536 if requested is None else int(requested)
    tile_p = min(target, cap, _round_up(hw_per_split, 128))
    tile_p = max(128, (tile_p // 128) * 128)
    return tile_p


def _multiloss_kernel(logits_ref, labels_ref,
                      ce_ref, inter_ref, psum_ref,
                      *, mask_pad: bool):
    n = pl.program_id(1)
    j = pl.program_id(2)

    @pl.when((n == 0) & (j == 0))
    def _():
        ce_ref[...] = jnp.zeros_like(ce_ref)
        inter_ref[...] = jnp.zeros_like(inter_ref)
        psum_ref[...] = jnp.zeros_like(psum_ref)

    x = logits_ref[0].astype(jnp.float32)      # (C, TP): classes on sublanes, pixels on lanes
    lbl = labels_ref[0]                        # (1, TP) int32; label = -1 marks padded pixels
    c = x.shape[0]

    # Numerically-stable softmax over classes via sublane (axis-0) reduces.
    # These lower to XLU work on full (8,128) vregs (own bundle slot), instead of
    # C-1 single-sublane VALU ops on 1/8-occupied vregs.
    m = jnp.max(x, axis=0, keepdims=True)      # (1, TP)
    z = x - m                                  # (C, TP)
    ez = jnp.exp(z)                            # EUP
    se = jnp.sum(ez, axis=0, keepdims=True)    # (1, TP)
    probs = ez / se                            # exact normalization (Dice accuracy)
    logse = jnp.log(se)                        # (1, TP)

    # One-hot targets via sublane iota compare (no gather).  Padded / out-of-range
    # labels produce an all-zero one-hot column automatically.
    cls = jax.lax.broadcasted_iota(jnp.int32, x.shape, 0)
    onehot = (cls == lbl).astype(jnp.float32)                  # (C, TP)
    valid = ((lbl >= 0) & (lbl < c)).astype(jnp.float32)       # (1, TP)

    # Cross-entropy collapsed to ONE lane row per pixel:
    #   -log_softmax(x)[true] = logse - z[true];  padded pixels contribute 0.
    zt = jnp.sum(onehot * z, axis=0, keepdims=True)            # (1, TP)
    ce_ref[0] += valid * logse - zt

    # Per-class Dice partials (element-wise only; reductions deferred to glue).
    inter_ref[0] += probs * onehot
    if mask_pad:
        psum_ref[0] += probs * valid           # exclude padded pixels from dice denom
    else:
        psum_ref[0] += probs


def multi_loss(logits_nchw, labels_nhw, weights=(1.0, 1.0),
               tile_pixels=None, n_splits=None, eps=1e-6):
    """Returns (total_loss, loss_dict) mirroring MultiLoss.forward (jnp scalars).

    logits may be f32 or bf16 (kernel casts to f32 internally); labels int.
    """
    n, c, h, w = logits_nchw.shape
    hw = h * w
    p = n * hw

    # Lane-dense layout: NCHW needs only a free reshape (no HBM transpose pass).
    logits = logits_nchw.reshape(n, c, hw)
    labels = labels_nhw.reshape(n, 1, hw).astype(jnp.int32)

    if n_splits is None:
        n_splits = _default_n_splits()
    if hw < 256 * n_splits:        # too small to be worth splitting
        n_splits = 1

    hw_per_split = -(-hw // n_splits)
    tile_p = _pick_tile_pixels(c, hw_per_split,
                               jnp.dtype(logits.dtype).itemsize, tile_pixels)
    tiles_per_split = -(-hw_per_split // tile_p)
    hw_pad = n_splits * tiles_per_split * tile_p
    if hw_pad != hw:
        logits = jnp.pad(logits, ((0, 0), (0, 0), (0, hw_pad - hw)))
        labels = jnp.pad(labels, ((0, 0), (0, 0), (0, hw_pad - hw)),
                         constant_values=-1)

    grid = (n_splits, n, tiles_per_split)
    pix_idx = lambda s, nn, j: (nn, 0, s * tiles_per_split + j)
    out_idx = lambda s, nn, j: (s, 0, 0)

    kernel = functools.partial(_multiloss_kernel, mask_pad=(hw_pad != hw))

    ce_p, inter_p, psum_p = pl.pallas_call(
        kernel,
        out_shape=(
            jax.ShapeDtypeStruct((n_splits, 1, tile_p), jnp.float32),   # CE partials
            jax.ShapeDtypeStruct((n_splits, c, tile_p), jnp.float32),   # intersection
            jax.ShapeDtypeStruct((n_splits, c, tile_p), jnp.float32),   # prob-sum
        ),
        grid_spec=pltpu.PrefetchScalarGridSpec(
            num_scalar_prefetch=0,
            grid=grid,
            in_specs=[
                pl.BlockSpec((1, c, tile_p), pix_idx),   # logits block (classes x pixels)
                pl.BlockSpec((1, 1, tile_p), pix_idx),   # labels block
            ],
            out_specs=[
                pl.BlockSpec((1, 1, tile_p), out_idx),
                pl.BlockSpec((1, c, tile_p), out_idx),
                pl.BlockSpec((1, c, tile_p), out_idx),
            ],
        ),
        compiler_params=pltpu.CompilerParams(
            dimension_semantics=("parallel", "arbitrary", "arbitrary"),
            vmem_limit_bytes=48 << 20),
    )(logits, labels)

    # ---- glue: the one-time reductions + MultiLoss combination ----
    ce_loss = jnp.sum(ce_p) / jnp.float32(p)                 # mean CE over all pixels
    inter = jnp.sum(inter_p, axis=(0, 2))                    # (C,)
    psum = jnp.sum(psum_p, axis=(0, 2))                      # (C,)
    # Per-class target counts straight from the tiny int label array (replaces
    # the former in-kernel tsum accumulator).
    lbl_flat = labels_nhw.reshape(-1).astype(jnp.int32)
    tsum = jnp.sum(
        (lbl_flat[:, None] == jnp.arange(c, dtype=jnp.int32)[None, :]).astype(jnp.float32),
        axis=0)
    dice_per_class = (2.0 * inter + eps) / (psum + tsum + eps)
    dice_loss = 1.0 - jnp.mean(dice_per_class)

    w0, w1 = weights
    total = w0 * ce_loss + w1 * dice_loss
    # TODO(synk): PyTorch returns .item() for 'Total'; we keep jnp scalars so the
    # whole loss stays jit-able without a host sync per training step.
    loss_dict = {
        "CrossEntropy": ce_loss,
        "Dice": dice_loss,
        "Total": total,
    }
    return total, loss_dict


def _reference(logits_nchw, labels_nhw, weights=(1.0, 1.0), eps=1e-6):
    n, c, h, w = logits_nchw.shape
    x = jnp.transpose(logits_nchw, (0, 2, 3, 1)).reshape(-1, c).astype(jnp.float32)
    lbl = labels_nhw.reshape(-1)
    logp = jax.nn.log_softmax(x, axis=-1)
    probs = jax.nn.softmax(x, axis=-1)
    onehot = jax.nn.one_hot(lbl, c, dtype=jnp.float32)
    ce = -jnp.mean(jnp.sum(onehot * logp, axis=-1))
    inter = jnp.sum(probs * onehot, axis=0)
    dice = (2.0 * inter + eps) / (jnp.sum(probs, 0) + jnp.sum(onehot, 0) + eps)
    dloss = 1.0 - jnp.mean(dice)
    return weights[0] * ce + weights[1] * dloss


if __name__ == "__main__":
    key = jax.random.PRNGKey(0)
    k1, k2 = jax.random.split(key)
    N, C, H, W = 2, 4, 16, 16
    logits = jax.random.normal(k1, (N, C, H, W), dtype=jnp.float32)
    labels = jax.random.randint(k2, (N, H, W), 0, C, dtype=jnp.int32)

    total, loss_dict = jax.jit(multi_loss)(logits, labels)
    total = jax.block_until_ready(total)

    ref = jax.block_until_ready(_reference(logits, labels))
    # Dice now uses exact softmax normalization, so the tolerance is tight.
    assert abs(float(total) - float(ref)) < 1e-3, (float(total), float(ref))

    print("KERNEL_OK")
</pallas_src>

<mosaic_0001>
module attributes {stable_mosaic.version = 11 : i64} {
  func.func @_multiloss_kernel(%arg0: i32, %arg1: i32, %arg2: i32, %arg3: memref<1x4x256xf32, #tpu.memory_space<vmem>>, %arg4: memref<1x1x256xi32, #tpu.memory_space<vmem>>, %arg5: memref<1x1x256xf32, #tpu.memory_space<vmem>>, %arg6: memref<1x4x256xf32, #tpu.memory_space<vmem>>, %arg7: memref<1x4x256xf32, #tpu.memory_space<vmem>>) attributes {dimension_semantics = [#tpu.dimension_semantics<parallel>, #tpu.dimension_semantics<arbitrary>, #tpu.dimension_semantics<arbitrary>], iteration_bounds = array<i64: 1, 2, 1>, scalar_prefetch = 0 : i64, scratch_operands = 0 : i64, tpu.core_type = #tpu.core_type<tc>, window_params = [{transform_indices = @transform_0, window_bounds = array<i64: 1, 4, 256>}, {transform_indices = @transform_1, window_bounds = array<i64: 1, 1, 256>}, {transform_indices = @transform_2, window_bounds = array<i64: 1, 1, 256>}, {transform_indices = @transform_3, window_bounds = array<i64: 1, 4, 256>}, {transform_indices = @transform_4, window_bounds = array<i64: 1, 4, 256>}]} {
    %c0_i32 = arith.constant 0 : i32
    %0 = arith.cmpi eq, %arg1, %c0_i32 : i32
    %c0_i32_0 = arith.constant 0 : i32
    %1 = arith.cmpi eq, %arg2, %c0_i32_0 : i32
    %2 = arith.andi %0, %1 : i1
    %3 = arith.extui %2 : i1 to i32
    %c0_i32_1 = arith.constant 0 : i32
    %4 = arith.cmpi ne, %3, %c0_i32_1 : i32
    scf.if %4 {
      %cst_28 = arith.constant 0.000000e+00 : f32
      %55 = vector.broadcast %cst_28 : f32 to vector<1x1x256xf32>
      %c0_29 = arith.constant 0 : index
      %c0_30 = arith.constant 0 : index
      %c0_31 = arith.constant 0 : index
      %56 = vector.load %arg5[%c0_29, %c0_30, %c0_31] : memref<1x1x256xf32, #tpu.memory_space<vmem>>, vector<1x1x256xf32>
      tpu.vector_store %arg5[%c0_29, %c0_30, %c0_31], %55 {strides = array<i32>} : memref<1x1x256xf32, #tpu.memory_space<vmem>>, vector<1x1x256xf32>,
      %cst_32 = arith.constant 0.000000e+00 : f32
      %57 = vector.broadcast %cst_32 : f32 to vector<1x4x256xf32>
      %c0_33 = arith.constant 0 : index
      %c0_34 = arith.constant 0 : index
      %c0_35 = arith.constant 0 : index
      %58 = vector.load %arg6[%c0_33, %c0_34, %c0_35] : memref<1x4x256xf32, #tpu.memory_space<vmem>>, vector<1x4x256xf32>
      tpu.vector_store %arg6[%c0_33, %c0_34, %c0_35], %57 {strides = array<i32>} : memref<1x4x256xf32, #tpu.memory_space<vmem>>, vector<1x4x256xf32>,
      %cst_36 = arith.constant 0.000000e+00 : f32
      %59 = vector.broadcast %cst_36 : f32 to vector<1x4x256xf32>
      %c0_37 = arith.constant 0 : index
      %c0_38 = arith.constant 0 : index
      %c0_39 = arith.constant 0 : index
      %60 = vector.load %arg7[%c0_37, %c0_38, %c0_39] : memref<1x4x256xf32, #tpu.memory_space<vmem>>, vector<1x4x256xf32>
      tpu.vector_store %arg7[%c0_37, %c0_38, %c0_39], %59 {strides = array<i32>} : memref<1x4x256xf32, #tpu.memory_space<vmem>>, vector<1x4x256xf32>,
    } else {
    }
    %c0 = arith.constant 0 : index
    %c0_2 = arith.constant 0 : index
    %c0_3 = arith.constant 0 : index
    %5 = vector.load %arg3[%c0, %c0_2, %c0_3] : memref<1x4x256xf32, #tpu.memory_space<vmem>>, vector<1x4x256xf32>
    %6 = vector.shape_cast %5 : vector<1x4x256xf32> to vector<4x256xf32>
    %c0_4 = arith.constant 0 : index
    %c0_5 = arith.constant 0 : index
    %c0_6 = arith.constant 0 : index
    %7 = vector.load %arg4[%c0_4, %c0_5, %c0_6] : memref<1x1x256xi32, #tpu.memory_space<vmem>>, vector<1x1x256xi32>
    %8 = vector.shape_cast %7 : vector<1x1x256xi32> to vector<1x256xi32>
    %cst = arith.constant dense<0xFF800000> : vector<256xf32>
    %9 = vector.multi_reduction <maximumf>, %6, %cst [0] : vector<4x256xf32> to vector<256xf32>
    %10 = vector.shape_cast %9 : vector<256xf32> to vector<1x256xf32>
    %11 = vector.broadcast %10 : vector<1x256xf32> to vector<4x256xf32>
    %12 = arith.subf %6, %11 : vector<4x256xf32>
    %13 = math.exp %12 : vector<4x256xf32>
    %cst_7 = arith.constant dense<0.000000e+00> : vector<256xf32>
    %14 = vector.multi_reduction <add>, %13, %cst_7 [0] : vector<4x256xf32> to vector<256xf32>
    %15 = vector.shape_cast %14 : vector<256xf32> to vector<1x256xf32>
    %16 = vector.broadcast %15 : vector<1x256xf32> to vector<4x256xf32>
    %17 = arith.divf %13, %16 : vector<4x256xf32>
    %18 = math.log %15 : vector<1x256xf32>
    %19 = tpu.iota {dimensions = array<i32: 0>} : vector<4x256xi32>
    %20 = vector.broadcast %8 : vector<1x256xi32> to vector<4x256xi32>
    %21 = arith.cmpi eq, %19, %20 : vector<4x256xi32>
    %22 = arith.extui %21 : vector<4x256xi1> to vector<4x256xi32>
    %23 = arith.sitofp %22 : vector<4x256xi32> to vector<4x256xf32>
    %c0_i32_8 = arith.constant 0 : i32
    %24 = vector.broadcast %c0_i32_8 : i32 to vector<1x256xi32>
    %25 = arith.cmpi sge, %8, %24 : vector<1x256xi32>
    %c4_i32 = arith.constant 4 : i32
    %26 = vector.broadcast %c4_i32 : i32 to vector<1x256xi32>
    %27 = arith.cmpi slt, %8, %26 : vector<1x256xi32>
    %28 = arith.andi %25, %27 : vector<1x256xi1>
    %29 = arith.extui %28 : vector<1x256xi1> to vector<1x256xi32>
    %30 = arith.sitofp %29 : vector<1x256xi32> to vector<1x256xf32>
    %31 = arith.mulf %23, %12 : vector<4x256xf32>
    %cst_9 = arith.constant dense<0.000000e+00> : vector<256xf32>
    %32 = vector.multi_reduction <add>, %31, %cst_9 [0] : vector<4x256xf32> to vector<256xf32>
    %33 = vector.shape_cast %32 : vector<256xf32> to vector<1x256xf32>
    %c0_10 = arith.constant 0 : index
    %c0_11 = arith.constant 0 : index
    %c0_12 = arith.constant 0 : index
    %34 = vector.load %arg5[%c0_10, %c0_11, %c0_12] : memref<1x1x256xf32, #tpu.memory_space<vmem>>, vector<1x1x256xf32>
    %35 = vector.shape_cast %34 : vector<1x1x256xf32> to vector<1x256xf32>
    %36 = arith.mulf %30, %18 : vector<1x256xf32>
    %37 = arith.subf %36, %33 : vector<1x256xf32>
    %38 = arith.addf %35, %37 : vector<1x256xf32>
    %c0_13 = arith.constant 0 : index
    %c0_14 = arith.constant 0 : index
    %c0_15 = arith.constant 0 : index
    %39 = vector.load %arg5[%c0_13, %c0_14, %c0_15] : memref<1x1x256xf32, #tpu.memory_space<vmem>>, vector<1x1x256xf32>
    %40 = vector.shape_cast %39 : vector<1x1x256xf32> to vector<1x256xf32>
    %41 = vector.shape_cast %38 : vector<1x256xf32> to vector<1x1x256xf32>
    tpu.vector_store %arg5[%c0_13, %c0_14, %c0_15], %41 {strides = array<i32>} : memref<1x1x256xf32, #tpu.memory_space<vmem>>, vector<1x1x256xf32>,
    %c0_16 = arith.constant 0 : index
    %c0_17 = arith.constant 0 : index
    %c0_18 = arith.constant 0 : index
    %42 = vector.load %arg6[%c0_16, %c0_17, %c0_18] : memref<1x4x256xf32, #tpu.memory_space<vmem>>, vector<1x4x256xf32>
    %43 = vector.shape_cast %42 : vector<1x4x256xf32> to vector<4x256xf32>
    %44 = arith.mulf %17, %23 : vector<4x256xf32>
    %45 = arith.addf %43, %44 : vector<4x256xf32>
    %c0_19 = arith.constant 0 : index
    %c0_20 = arith.constant 0 : index
    %c0_21 = arith.constant 0 : index
    %46 = vector.load %arg6[%c0_19, %c0_20, %c0_21] : memref<1x4x256xf32, #tpu.memory_space<vmem>>, vector<1x4x256xf32>
    %47 = vector.shape_cast %46 : vector<1x4x256xf32> to vector<4x256xf32>
    %48 = vector.shape_cast %45 : vector<4x256xf32> to vector<1x4x256xf32>
    tpu.vector_store %arg6[%c0_19, %c0_20, %c0_21], %48 {strides = array<i32>} : memref<1x4x256xf32, #tpu.memory_space<vmem>>, vector<1x4x256xf32>,
    %c0_22 = arith.constant 0 : index
    %c0_23 = arith.constant 0 : index
    %c0_24 = arith.constant 0 : index
    %49 = vector.load %arg7[%c0_22, %c0_23, %c0_24] : memref<1x4x256xf32, #tpu.memory_space<vmem>>, vector<1x4x256xf32>
    %50 = vector.shape_cast %49 : vector<1x4x256xf32> to vector<4x256xf32>
    %51 = arith.addf %50, %17 : vector<4x256xf32>
    %c0_25 = arith.constant 0 : index
    %c0_26 = arith.constant 0 : index
    %c0_27 = arith.constant 0 : index
    %52 = vector.load %arg7[%c0_25, %c0_26, %c0_27] : memref<1x4x256xf32, #tpu.memory_space<vmem>>, vector<1x4x256xf32>
    %53 = vector.shape_cast %52 : vector<1x4x256xf32> to vector<4x256xf32>
    %54 = vector.shape_cast %51 : vector<4x256xf32> to vector<1x4x256xf32>
    tpu.vector_store %arg7[%c0_25, %c0_26, %c0_27], %54 {strides = array<i32>} : memref<1x4x256xf32, #tpu.memory_space<vmem>>, vector<1x4x256xf32>,
    return
  }
  func.func @transform_0(%arg0: i32, %arg1: i32, %arg2: i32) -> (i32, i32, i32) {
    %c1_i32 = arith.constant 1 : i32
    %0 = arith.muli %arg0, %c1_i32 : i32
    %1 = arith.addi %0, %arg2 : i32
    %c0_i32 = arith.constant 0 : i32
    %c0_i32_0 = arith.constant 0 : i32
    return %arg1, %c0_i32, %1 : i32, i32, i32
  }
  func.func @transform_1(%arg0: i32, %arg1: i32, %arg2: i32) -> (i32, i32, i32) {
    %c1_i32 = arith.constant 1 : i32
    %0 = arith.muli %arg0, %c1_i32 : i32
    %1 = arith.addi %0, %arg2 : i32
    %c0_i32 = arith.constant 0 : i32
    %c0_i32_0 = arith.constant 0 : i32
    return %arg1, %c0_i32, %1 : i32, i32, i32
  }
  func.func @transform_2(%arg0: i32, %arg1: i32, %arg2: i32) -> (i32, i32, i32) {
    %c0_i32 = arith.constant 0 : i32
    %c0_i32_0 = arith.constant 0 : i32
    %c0_i32_1 = arith.constant 0 : i32
    return %arg0, %c0_i32, %c0_i32_0 : i32, i32, i32
  }
  func.func @transform_3(%arg0: i32, %arg1: i32, %arg2: i32) -> (i32, i32, i32) {
    %c0_i32 = arith.constant 0 : i32
    %c0_i32_0 = arith.constant 0 : i32
    %c0_i32_1 = arith.constant 0 : i32
    return %arg0, %c0_i32, %c0_i32_0 : i32, i32, i32
  }
  func.func @transform_4(%arg0: i32, %arg1: i32, %arg2: i32) -> (i32, i32, i32) {
    %c0_i32 = arith.constant 0 : i32
    %c0_i32_0 = arith.constant 0 : i32
    %c0_i32_1 = arith.constant 0 : i32
    return %arg0, %c0_i32, %c0_i32_0 : i32, i32, i32
  }
}

</mosaic_0001>

<llo_original>
// kernel: eq.8
$region0: #{eq.8}
  %s0 = inlined_call_operand.vmem [shape: s32[2,16,16], index: 0, kind: input, shape index: {}]
  %s1 = inlined_call_operand.vmem [shape: s32[512], index: 1, kind: output, shape index: {}]
  $region1: #{eq.8} parent=0
    #allocation0 [shape = 'u8[4096]{0}', space=vmem, size = 0x1000, scoped, tag = 'scoped mem for output reshape']
    %v2 = vld [vmem:[%s0] ss:$8 sm:$0xf]
    %vm3 = vcmask 130048
    %4 = vst.msk [vmem:[#allocation0] sm:$0xf] %vm3, %v2
    %s5 = scalar_lea.vmem %s0, 7
    %v6 = vld [vmem:[%s5] ss:$8 sm:$0xf]
    %7 = vrot.lane.b32.xlu0 %v6, 112
    %v8 = vpop.permute.xlu0 %7
    %vm9 = vcmask 1048448
    %10 = vst.msk [vmem:[#allocation0] sm:$0xf] %vm9, %v8
    %s11 = scalar_lea.vmem %s0, 6
    %v12 = vld [vmem:[%s11] ss:$8 sm:$0xf]
    %13 = vrot.lane.b32.xlu0 %v12, 96
    %v14 = vpop.permute.xlu0 %13
    %vm15 = vcmask 917248
    %16 = vst.msk [vmem:[#allocation0] sm:$0xf] %vm15, %v14
    %s17 = scalar_lea.vmem %s0, 5
    %v18 = vld [vmem:[%s17] ss:$8 sm:$0xf]
    %19 = vrot.lane.b32.xlu0 %v18, 80
    %v20 = vpop.permute.xlu0 %19
    %vm21 = vcmask 786048
    %22 = vst.msk [vmem:[#allocation0] sm:$0xf] %vm21, %v20
    %s23 = scalar_lea.vmem %s0, 4
    %v24 = vld [vmem:[%s23] ss:$8 sm:$0xf]
    %25 = vrot.lane.b32.xlu0 %v24, 64
    %v26 = vpop.permute.xlu0 %25
    %vm27 = vcmask 654848
    %28 = vst.msk [vmem:[#allocation0] sm:$0xf] %vm27, %v26
    %s29 = scalar_lea.vmem %s0, 3
    %v30 = vld [vmem:[%s29] ss:$8 sm:$0xf]
    %31 = vrot.lane.b32.xlu0 %v30, 48
    %v32 = vpop.permute.xlu0 %31
    %vm33 = vcmask 523648
    %34 = vst.msk [vmem:[#allocation0] sm:$0xf] %vm33, %v32
    %s35 = scalar_lea.vmem %s0, 2
    %v36 = vld [vmem:[%s35] ss:$8 sm:$0xf]
    %37 = vrot.lane.b32.xlu0 %v36, 32
    %v38 = vpop.permute.xlu0 %37
    %vm39 = vcmask 392448
    %40 = vst.msk [vmem:[#allocation0] sm:$0xf] %vm39, %v38
    %s41 = scalar_lea.vmem %s0, 1
    %v42 = vld [vmem:[%s41] ss:$8 sm:$0xf]
    %43 = vrot.lane.b32.xlu0 %v42, 16
    %v44 = vpop.permute.xlu0 %43
    %vm45 = vcmask 261248
    %46 = vst.msk [vmem:[#allocation0] sm:$0xf] %vm45, %v44
    %s48 = sshll.u32 1, 4
    %s49 = ssub.s32 %s48, 1
    %v51 = vld [vmem:[#allocation0] sm:%s49]
    %s52 = sshll.u32 1, 4
    %s53 = ssub.s32 %s52, 1
    %54 = vst [vmem:[%s1] sm:%s53] %v51

// kernel: multi_loss.1
$region0: #{multi_loss.1}
  #allocation0 [shape = 'u32[]', space=smem, size = 0x4, offset = 0x4, fixed_abs, tag = 'smem constant byte address 0x4 - core index']
  #allocation1 [shape = 'u32[144,128]{1,0:T(1,128)}', space=vmem, size = 0x12000, scoped, tag = 'internal scratch']
  %s0 = inlined_call_operand.vmem [shape: f32[2,4,256], index: 0, kind: input, shape index: {}]
  %s1 = inlined_call_operand.vmem [shape: s32[2,1,256], index: 1, kind: input, shape index: {}]
  %s2 = inlined_call_operand.vmem [shape: f32[1,1,256], index: 2, kind: output, shape index: {0}]
  %s3 = inlined_call_operand.vmem [shape: f32[1,4,256], index: 3, kind: output, shape index: {1}]
  %s4 = inlined_call_operand.vmem [shape: f32[1,4,256], index: 4, kind: output, shape index: {2}]
  %5 = xla_tuple %s2, %s3, %s4
  %s6 = sld [smem:[#allocation0]]
  $region61: #{multi_loss.1} parent=0
    _
  %s8 = ssub.s32 1, %s6
  %s9 = scalar_select 0, %s8, %s6
  loop: start=0, step=1, limit=4
  $region2: #{multi_loss.1} parent=0 // loop_pre_header
    _
  $region3: #{multi_loss.1} parent=0 // loop_header
    %s11 = sphi 0, %s15
    %p12 = scmp.ge.s32.totalorder %s11, 4
    %s18 = sphi 0, %s37
    %s19 = sphi 0, %s33
    %s20 = sphi 0, %s29
    %s21 = sphi 0, %s18
    %s22 = sphi 0, %s19
    %s23 = sphi 0, %s20
    %s24 = sphi 0, %s21
    %s25 = sphi 0, %s22
    %s26 = sphi 0, %s23
    %s44 = sphi 0, %s46
    %s47 = sphi 0, %s44
    %s48 = sphi 0, %s47
    %s64 = sphi 0, %s48
    %s74 = sphi 0, %s76
    %s77 = sphi 0, %s74
    %s78 = sphi 0, %s77
    %s94 = sphi 0, %s78
    %s100 = sphi 0, %s102
    %s103 = sphi 0, %s100
    %s104 = sphi 0, %s103
    %s120 = sphi 0, %s104
    %s126 = sphi 0, %s128
    %s129 = sphi 0, %s126
    %s130 = sphi 0, %s129
    %s146 = sphi 0, %s130
    %s152 = sphi 0, %s154
    %s155 = sphi 0, %s152
    %s156 = sphi 0, %s155
    %s172 = sphi 0, %s156
  $region4: #{multi_loss.1} parent=0 // loop_header_branch
    %14 = sbr.rel (%p12) target = $region8
  $region5: #{multi_loss.1} parent=0 // loop_body
    %s16 = ssub.s32 %s11, 1
    %s17 = ssub.s32 %s11, 2
    %s27 = sadd.s32 1, %s20
    %p28 = scmp.ge.s32.totalorder %s27, 1
    %s29 = scalar_select %p28, 0, %s27
    %s30 = sadd.s32 1, %s19
    %s31 = scalar_select %p28, %s30, %s19
    %p32 = scmp.ge.s32.totalorder %s31, 2
    %s33 = scalar_select %p32, 0, %s31
    %s34 = sadd.s32 1, %s18
    %s35 = scalar_select %p32, %s34, %s18
    %p36 = scmp.ge.s32.totalorder %s35, 1
    %s37 = scalar_select %p36, 0, %s35
    %s38 = sadd.s32 %s18, %s20
    %s39 = sadd.s32 %s37, %s29
    %s40 = ssub.s32 %s19, %s33
    %s41 = ssub.s32 %s38, %s39
    %s42 = sor.u32 %s40, %s41
    %p43 = scmp.eq.s32.totalorder %s42, 0
    %s45 = sadd.s32 %s44, 1
    %s46 = scalar_select %p43, %s44, %s45
    %p49 = pneg %p43
    %p50 = scmp.eq.s32.totalorder %s11, 1
    %p51 = por %p49, %p50
    %p52 = scmp.ne.s32.totalorder %s44, %s47
    %p53 = scmp.eq.s32.totalorder %s11, 0
    %p54 = por %p52, %p53
    %p55 = scmp.ne.s32.totalorder %s44, %s47
    %p56 = scmp.eq.s32.totalorder %s16, 1
    %p57 = por %p55, %p56
    %p58 = scmp.ne.s32.totalorder %s47, %s48
    %p59 = scmp.eq.s32.totalorder %s16, 0
    %p60 = por %p58, %p59
    %p61 = scmp.ne.s32.totalorder %s47, %s48
    %p62 = scmp.eq.s32.totalorder %s17, 1
    %p63 = por %p61, %p62
    %p65 = scmp.ne.s32.totalorder %s48, %s64
    %p66 = scmp.eq.s32.totalorder %s17, 0
    %p67 = por %p65, %p66
    %s68 = sadd.s32 %s18, %s20
    %s69 = sadd.s32 %s37, %s29
    %s70 = ssub.s32 %s19, %s33
    %s71 = ssub.s32 %s68, %s69
    %s72 = sor.u32 %s70, %s71
    %p73 = scmp.eq.s32.totalorder %s72, 0
    %s75 = sadd.s32 %s74, 1
    %s76 = scalar_select %p73, %s74, %s75
    %p79 = pneg %p73
    %p80 = scmp.eq.s32.totalorder %s11, 1
    %p81 = por %p79, %p80
    %p82 = scmp.ne.s32.totalorder %s74, %s77
    %p83 = scmp.eq.s32.totalorder %s11, 0
    %p84 = por %p82, %p83
    %p85 = scmp.ne.s32.totalorder %s74, %s77
    %p86 = scmp.eq.s32.totalorder %s16, 1
    %p87 = por %p85, %p86
    %p88 = scmp.ne.s32.totalorder %s77, %s78
    %p89 = scmp.eq.s32.totalorder %s16, 0
    %p90 = por %p88, %p89
    %p91 = scmp.ne.s32.totalorder %s77, %s78
    %p92 = scmp.eq.s32.totalorder %s17, 1
    %p93 = por %p91, %p92
    %p95 = scmp.ne.s32.totalorder %s78, %s94
    %p96 = scmp.eq.s32.totalorder %s17, 0
    %p97 = por %p95, %p96
    %s98 = ssub.s32 %s18, %s37
    %p99 = scmp.eq.s32.totalorder %s98, 0
    %s101 = sadd.s32 %s100, 1
    %s102 = scalar_select %p99, %s100, %s101
    %p105 = pneg %p99
    %p106 = scmp.eq.s32.totalorder %s11, 1
    %p107 = por %p105, %p106
    %p108 = scmp.ne.s32.totalorder %s100, %s103
    %p109 = scmp.eq.s32.totalorder %s11, 0
    %p110 = por %p108, %p109
    %p111 = scmp.ne.s32.totalorder %s100, %s103
    %p112 = scmp.eq.s32.totalorder %s16, 1
    %p113 = por %p111, %p112
    %p114 = scmp.ne.s32.totalorder %s103, %s104
    %p115 = scmp.eq.s32.totalorder %s16, 0
    %p116 = por %p114, %p115
    %p117 = scmp.ne.s32.totalorder %s103, %s104
    %p118 = scmp.eq.s32.totalorder %s17, 1
    %p119 = por %p117, %p118
    %p121 = scmp.ne.s32.totalorder %s104, %s120
    %p122 = scmp.eq.s32.totalorder %s17, 0
    %p123 = por %p121, %p122
    %s124 = ssub.s32 %s18, %s37
    %p125 = scmp.eq.s32.totalorder %s124, 0
    %s127 = sadd.s32 %s126, 1
    %s128 = scalar_select %p125, %s126, %s127
    %p131 = pneg %p125
    %p132 = scmp.eq.s32.totalorder %s11, 1
    %p133 = por %p131, %p132
    %p134 = scmp.ne.s32.totalorder %s126, %s129
    %p135 = scmp.eq.s32.totalorder %s11, 0
    %p136 = por %p134, %p135
    %p137 = scmp.ne.s32.totalorder %s126, %s129
    %p138 = scmp.eq.s32.totalorder %s16, 1
    %p139 = por %p137, %p138
    %p140 = scmp.ne.s32.totalorder %s129, %s130
    %p141 = scmp.eq.s32.totalorder %s16, 0
    %p142 = por %p140, %p141
    %p143 = scmp.ne.s32.totalorder %s129, %s130
    %p144 = scmp.eq.s32.totalorder %s17, 1
    %p145 = por %p143, %p144
    %p147 = scmp.ne.s32.totalorder %s130, %s146
    %p148 = scmp.eq.s32.totalorder %s17, 0
    %p149 = por %p147, %p148
    %s150 = ssub.s32 %s18, %s37
    %p151 = scmp.eq.s32.totalorder %s150, 0
    %s153 = sadd.s32 %s152, 1
    %s154 = scalar_select %p151, %s152, %s153
    %p157 = pneg %p151
    %p158 = scmp.eq.s32.totalorder %s11, 1
    %p159 = por %p157, %p158
    %p160 = scmp.ne.s32.totalorder %s152, %s155
    %p161 = scmp.eq.s32.totalorder %s11, 0
    %p162 = por %p160, %p161
    %p163 = scmp.ne.s32.totalorder %s152, %s155
    %p164 = scmp.eq.s32.totalorder %s16, 1
    %p165 = por %p163, %p164
    %p166 = scmp.ne.s32.totalorder %s155, %s156
    %p167 = scmp.eq.s32.totalorder %s16, 0
    %p168 = por %p166, %p167
    %p169 = scmp.ne.s32.totalorder %s155, %s156
    %p170 = scmp.eq.s32.totalorder %s17, 1
    %p171 = por %p169, %p170
    %p173 = scmp.ne.s32.totalorder %s156, %s172
    %p174 = scmp.eq.s32.totalorder %s17, 0
    %p175 = por %p173, %p174
    %p176 = scmp.le.s32.totalorder 1, %s11
    %p177 = scmp.lt.s32.totalorder %s11, 3
    %p178 = pnand %p176, %p177
    %p179 = pneg %p178
    // Predicated region
    $region9: #{multi_loss.1} parent=5 // pred_check
      _
    $region10: #{multi_loss.1} parent=5 // pred_check_branch
      %181 = sbr.rel (%p178) target = $region12
    $region11: #{multi_loss.1} parent=5 // pred_region
      %s182 = ssub.s32 %s11, 1
    $region12: #{multi_loss.1} parent=5 // pred_fallthru
      _
    %p183 = scmp.lt.s32.totalorder %s11, 2
    // Predicated region
    $region13: #{multi_loss.1} parent=5 // pred_check
      %p184 = pneg %p183
    $region14: #{multi_loss.1} parent=5 // pred_check_branch
      %186 = sbr.rel (%p184) target = $region16
    $region15: #{multi_loss.1} parent=5 // pred_region
      // Predicated region
      $region17: #{multi_loss.1} parent=15 // pred_check
        %p187 = pneg %p54
      $region18: #{multi_loss.1} parent=15 // pred_check_branch
        %189 = sbr.rel (%p187) target = $region20
      $region19: #{multi_loss.1} parent=15 // pred_region
        %s190 = sadd.s32 %s18, %s20
        %s191 = smul.u32 2, %s190
        %p192 = scmp.lt.s32.totalorder %s19, 1
        %s193 = scalar_select %p192, %s19, 1
        %p194 = scmp.lt.s32.totalorder %s191, 1
        %s195 = scalar_select %p194, %s191, 1
        %s196 = smul.addr %s193, 2
        %s197 = sadd.s32 %s195, %s196
        %s198 = smul.addr %s197, 4
        %s199 = scalar_lea.vmem %s0, %s198
        %s200 = sadd.s32 %s18, %s20
        %s201 = smul.u32 2, %s200
      $region20: #{multi_loss.1} parent=15 // pred_fallthru
        _
      // Predicated region
      $region21: #{multi_loss.1} parent=15 // pred_check
        %p202 = pneg %p84
      $region22: #{multi_loss.1} parent=15 // pred_check_branch
        %204 = sbr.rel (%p202) target = $region24
      $region23: #{multi_loss.1} parent=15 // pred_region
        %s205 = sadd.s32 %s18, %s20
        %s206 = smul.u32 2, %s205
        %p207 = scmp.lt.s32.totalorder %s19, 1
        %s208 = scalar_select %p207, %s19, 1
        %p209 = scmp.lt.s32.totalorder %s206, 1
        %s210 = scalar_select %p209, %s206, 1
        %s211 = smul.addr %s208, 2
        %s212 = sadd.s32 %s210, %s211
        %s213 = scalar_lea.vmem %s1, %s212
        %s214 = sadd.s32 %s18, %s20
        %s215 = smul.u32 2, %s214
      $region24: #{multi_loss.1} parent=15 // pred_fallthru
        _
    $region16: #{multi_loss.1} parent=5 // pred_fallthru
      _
    %p216 = scmp.le.s32.totalorder 1, %s11
    %p217 = scmp.lt.s32.totalorder %s11, 3
    %p218 = pnand %p216, %p217
    %p219 = pneg %p218
    // Predicated region
    $region25: #{multi_loss.1} parent=5 // pred_check
      _
    $region26: #{multi_loss.1} parent=5 // pred_check_branch
      %221 = sbr.rel (%p218) target = $region28
    $region27: #{multi_loss.1} parent=5 // pred_region
      %s222 = ssub.s32 %s11, 1
      %s223 = sadd.s32 %s21, %s23
      %s224 = smul.u32 2, %s223
      %p225 = scmp.lt.s32.totalorder %s22, 1
      %s226 = scalar_select %p225, %s22, 1
      %p227 = scmp.lt.s32.totalorder %s224, 1
      %s228 = scalar_select %p227, %s224, 1
      %s229 = smul.addr %s226, 2
      %s230 = sadd.s32 %s228, %s229
      %s231 = smul.addr %s230, 4
      %s232 = scalar_lea.vmem %s0, %s231
      %p233 = pneg %p60
      %p234 = pneg %p57
      %s235 = sadd.s32 %s21, %s23
      %s236 = smul.u32 2, %s235
      %p237 = scmp.lt.s32.totalorder %s22, 1
      %s238 = scalar_select %p237, %s22, 1
      %p239 = scmp.lt.s32.totalorder %s236, 1
      %s240 = scalar_select %p239, %s236, 1
      %s241 = smul.addr %s238, 2
      %s242 = sadd.s32 %s240, %s241
      %s243 = scalar_lea.vmem %s1, %s242
      %p244 = pneg %p90
      %p245 = pneg %p87
      %p246 = pneg %p116
      %p247 = pneg %p113
      %p248 = scmp.lt.s32.totalorder %s21, 0
      %s249 = scalar_select %p248, %s21, 0
      %s250 = smul.addr %s249, 2
      %s251 = scalar_lea.vmem %s2, %s250
      %p252 = pneg %p142
      %p253 = pneg %p139
      %p254 = scmp.lt.s32.totalorder %s21, 0
      %s255 = scalar_select %p254, %s21, 0
      %s256 = smul.addr %s255, 2
      %s257 = smul.addr %s256, 4
      %s258 = scalar_lea.vmem %s3, %s257
      %p259 = pneg %p168
      %p260 = pneg %p165
      %p261 = scmp.lt.s32.totalorder %s21, 0
      %s262 = scalar_select %p261, %s21, 0
      %s263 = smul.addr %s262, 2
      %s264 = smul.addr %s263, 4
      %s265 = scalar_lea.vmem %s4, %s264
      %s266 = sadd.s32 %s21, %s23
      %s267 = smul.u32 2, %s266
      %p268 = scmp.lt.s32.totalorder %s22, 1
      %s269 = scalar_select %p268, %s22, 1
      %p270 = scmp.lt.s32.totalorder %s267, 1
      %s271 = scalar_select %p270, %s267, 1
      %s272 = smul.addr %s269, 2
      %s273 = sadd.s32 %s271, %s272
      %s274 = smul.addr %s273, 4
      %s275 = scalar_lea.vmem %s0, %s274
      %s276 = sadd.s32 %s21, %s23
      %s277 = smul.u32 2, %s276
      %s278 = sadd.s32 %s21, %s23
      %s279 = smul.u32 2, %s278
      %p280 = scmp.lt.s32.totalorder %s22, 1
      %s281 = scalar_select %p280, %s22, 1
      %p282 = scmp.lt.s32.totalorder %s279, 1
      %s283 = scalar_select %p282, %s279, 1
      %s284 = smul.addr %s281, 2
      %s285 = sadd.s32 %s283, %s284
      %s286 = scalar_lea.vmem %s1, %s285
      %s287 = sadd.s32 %s21, %s23
      %s288 = smul.u32 2, %s287
      %p289 = scmp.lt.s32.totalorder %s21, 0
      %s290 = scalar_select %p289, %s21, 0
      %s291 = smul.addr %s290, 2
      %s292 = scalar_lea.vmem %s2, %s291
      %p293 = scmp.lt.s32.totalorder %s21, 0
      %s294 = scalar_select %p293, %s21, 0
      %s295 = smul.addr %s294, 2
      %s296 = smul.addr %s295, 4
      %s297 = scalar_lea.vmem %s3, %s296
      %p298 = scmp.lt.s32.totalorder %s21, 0
      %s299 = scalar_select %p298, %s21, 0
      %s300 = smul.addr %s299, 2
      %s301 = smul.addr %s300, 4
      %s302 = scalar_lea.vmem %s4, %s301
      %p303 = scmp.eq.s32.totalorder %s22, 0
      %p304 = scmp.eq.s32.totalorder %s23, 0
      %p305 = pnand %p303, %p304
      %p306 = pneg %p305
      // Predicated region
      $region29: #{multi_loss.1} parent=27 // pred_check
        _
      $region30: #{multi_loss.1} parent=27 // pred_check_branch
        %308 = sbr.rel (%p305) target = $region32
      $region31: #{multi_loss.1} parent=27 // pred_region
        %v309 = vlaneseq
        %vm310 = vcmp.ge.s32.totalorder %v309, 0
        %vm311 = vcmp.lt.s32.totalorder %v309, 256
        %vm312 = vmand %vm310, %vm311
        %313 = vst.msk [vmem:[%s292] sm:$0x3] %vm312, 0.0
        %314 = vst [vmem:[%s297] sm:$0xff] 0.0
        %315 = vst [vmem:[%s302] sm:$0xff] 0.0
      $region32: #{multi_loss.1} parent=27 // pred_fallthru
        _
      %v316 = vld [vmem:[%s275] sm:$0xff]
      %v317 = vld [vmem:[%s286] sm:$0x3]
      %v319 = vcombine.high %v316, %v316
      %vm321 = vcmask 1043456
      %v322 = vsel %vm321, %v316, -inf
      %v323 = vrot.slane %v322, 4
      %v324 = vmax.f32 %v322, %v323
      %v325 = vrot.slane %v324, 2
      %v326 = vmax.f32 %v324, %v325
      %v327 = vrot.slane %v326, 1
      %v328 = vmax.f32 %v326, %v327
      %v329 = vsel %vm321, %v319, -inf
      %v330 = vrot.slane %v329, 4
      %v331 = vmax.f32 %v329, %v330
      %v332 = vrot.slane %v331, 2
      %v333 = vmax.f32 %v331, %v332
      %v334 = vrot.slane %v333, 1
      %v335 = vmax.f32 %v333, %v334
      %v338 = vcombine.low %v328, %v335
      %v340 = vsub.f32 %v316, %v338
      %v341 = vmul.f32 %v340, 1.442695
      %v342 = vpow.pop %v341
      %v344 = vcombine.high %v342, %v342
      %v346 = vsel %vm321, %v342, 0.0
      %v347 = vrot.slane %v346, 4
      %v348 = vadd.f32 %v346, %v347
      %v349 = vrot.slane %v348, 2
      %v350 = vadd.f32 %v348, %v349
      %v351 = vrot.slane %v350, 1
      %v352 = vadd.f32 %v350, %v351
      %v353 = vsel %vm321, %v344, 0.0
      %v354 = vrot.slane %v353, 4
      %v355 = vadd.f32 %v353, %v354
      %v356 = vrot.slane %v355, 2
      %v357 = vadd.f32 %v355, %v356
      %v358 = vrot.slane %v357, 1
      %v359 = vadd.f32 %v357, %v358
      %v362 = vcombine.low %v352, %v359
      %v364 = vrcp.pop %v362
      %v365 = vmul.f32 %v342, %v364
      %v366 = vlog2.pop %v352
      %v367 = vmul.f32 %v366, 0.6931472
      %v368 = vlog2.pop %v359
      %v369 = vmul.f32 %v368, 0.6931472
      %v370 = vlaneseq
      %v371 = vshrl.u32 %v370, 7
      %v372 = vlaneseq
      %v373 = vshrl.u32 %v372, 7
      %v374 = vsub.s32 0, %v373
      %v375 = vrot.slane %v317, %v374
      %v376 = vlaneseq
      %v377 = vshrl.u32 %v376, 7
      %v378 = vsub.s32 1, %v377
      %v379 = vrot.slane %v317, %v378
      %vm380 = vcmp.eq.s32.totalorder %v371, %v375
      %vm381 = vcmp.eq.s32.totalorder %v371, %v379
      %v382 = vsel %vm380, 1, 0
      %v383 = vsel %vm381, 1, 0
      %v384 = vcvt.s32.f32 %v382
      %v385 = vcvt.s32.f32 %v383
      %vm386 = vcmp.ge.s32.totalorder %v317, 0
      %vm387 = vcmp.lt.s32.totalorder %v317, 4
      %vm388 = vmand %vm386, %vm387
      %v389 = vsel %vm388, 1, 0
      %v390 = vcvt.s32.f32 %v389
      %v392 = vcombine.high %v340, %v340
      %v394 = vmul.f32 %v384, %v340
      %v395 = vmul.f32 %v385, %v392
      %v396 = vsel %vm321, %v394, 0.0
      %v397 = vrot.slane %v396, 4
      %v398 = vadd.f32 %v396, %v397
      %v399 = vrot.slane %v398, 2
      %v400 = vadd.f32 %v398, %v399
      %v401 = vrot.slane %v400, 1
      %v402 = vadd.f32 %v400, %v401
      %v403 = vsel %vm321, %v395, 0.0
      %v404 = vrot.slane %v403, 4
      %v405 = vadd.f32 %v403, %v404
      %v406 = vrot.slane %v405, 2
      %v407 = vadd.f32 %v405, %v406
      %v408 = vrot.slane %v407, 1
      %v409 = vadd.f32 %v407, %v408
      %v410 = vld [vmem:[%s292] sm:$0x3]
      %v413 = vcombine.low %v367, %v369
      %v415 = vunpack.c.l.s4 1966171168
      %v416 = vunpack.c.0.s8 %v415
      %v417 = vlaneseq
      %v418 = vshrl.u32 %v417, 7
      %v419 = vsub.s32 %v416, %v418
      %v420 = vrot.slane %v413, %v419
      %v422 = vunpack.c.l.s4 1966171168
      %v423 = vunpack.c.0.s8 %v422
      %v424 = vlaneseq
      %v425 = vshrl.u32 %v424, 7
      %v426 = vsub.s32 %v423, %v425
      %v427 = vrot.slane %v420, %v426
      %v429 = vmul.f32 %v390, %v427
      %v432 = vcombine.low %v402, %v409
      %v434 = vunpack.c.l.s4 1966171168
      %v435 = vunpack.c.0.s8 %v434
      %v436 = vlaneseq
      %v437 = vshrl.u32 %v436, 7
      %v438 = vsub.s32 %v435, %v437
      %v439 = vrot.slane %v432, %v438
      %v441 = vunpack.c.l.s4 1966171168
      %v442 = vunpack.c.0.s8 %v441
      %v443 = vlaneseq
      %v444 = vshrl.u32 %v443, 7
      %v445 = vsub.s32 %v442, %v444
      %v446 = vrot.slane %v439, %v445
      %v448 = vsub.f32 %v429, %v446
      %v449 = vadd.f32 %v410, %v448
      %v450 = vlaneseq
      %vm451 = vcmp.ge.s32.totalorder %v450, 0
      %vm452 = vcmp.lt.s32.totalorder %v450, 256
      %vm453 = vmand %vm451, %vm452
      %454 = vst.msk [vmem:[%s292] sm:$0x3] %vm453, %v449
      %v455 = vld [vmem:[%s297] sm:$0xff]
      %v458 = vcombine.low %v384, %v385
      %v460 = vmul.f32 %v365, %v458
      %v461 = vadd.f32 %v455, %v460
      %462 = vst [vmem:[%s297] sm:$0xff] %v461
      %v463 = vld [vmem:[%s302] sm:$0xff]
      %v464 = vadd.f32 %v463, %v365
      %465 = vst [vmem:[%s302] sm:$0xff] %v464
      %p466 = scmp.lt.s32.totalorder %s21, 0
      %s467 = scalar_select %p466, %s21, 0
      %s468 = smul.addr %s467, 2
      %s469 = scalar_lea.vmem %s2, %s468
      %p470 = scmp.lt.s32.totalorder %s21, 0
      %s471 = scalar_select %p470, %s21, 0
      %s472 = smul.addr %s471, 2
      %s473 = smul.addr %s472, 4
      %s474 = scalar_lea.vmem %s3, %s473
      %p475 = scmp.lt.s32.totalorder %s21, 0
      %s476 = scalar_select %p475, %s21, 0
      %s477 = smul.addr %s476, 2
      %s478 = smul.addr %s477, 4
      %s479 = scalar_lea.vmem %s4, %s478
      // Predicated region
      $region33: #{multi_loss.1} parent=27 // pred_check
        %p480 = pneg %p113
      $region34: #{multi_loss.1} parent=27 // pred_check_branch
        %482 = sbr.rel (%p480) target = $region36
      $region35: #{multi_loss.1} parent=27 // pred_region
        _
      $region36: #{multi_loss.1} parent=27 // pred_fallthru
        _
      // Predicated region
      $region37: #{multi_loss.1} parent=27 // pred_check
        %p483 = pneg %p139
      $region38: #{multi_loss.1} parent=27 // pred_check_branch
        %485 = sbr.rel (%p483) target = $region40
      $region39: #{multi_loss.1} parent=27 // pred_region
        _
      $region40: #{multi_loss.1} parent=27 // pred_fallthru
        _
      // Predicated region
      $region41: #{multi_loss.1} parent=27 // pred_check
        %p486 = pneg %p165
      $region42: #{multi_loss.1} parent=27 // pred_check_branch
        %488 = sbr.rel (%p486) target = $region44
      $region43: #{multi_loss.1} parent=27 // pred_region
        _
      $region44: #{multi_loss.1} parent=27 // pred_fallthru
        _
      // Predicated region
      $region45: #{multi_loss.1} parent=27 // pred_check
        %p489 = pneg %p113
      $region46: #{multi_loss.1} parent=27 // pred_check_branch
        %491 = sbr.rel (%p489) target = $region48
      $region47: #{multi_loss.1} parent=27 // pred_region
        %p492 = scmp.lt.s32.totalorder %s21, 0
        %s493 = scalar_select %p492, %s21, 0
        %s494 = smul.addr %s493, 2
        %s495 = scalar_lea.vmem %s2, %s494
      $region48: #{multi_loss.1} parent=27 // pred_fallthru
        _
      // Predicated region
      $region49: #{multi_loss.1} parent=27 // pred_check
        %p496 = pneg %p139
      $region50: #{multi_loss.1} parent=27 // pred_check_branch
        %498 = sbr.rel (%p496) target = $region52
      $region51: #{multi_loss.1} parent=27 // pred_region
        %p499 = scmp.lt.s32.totalorder %s21, 0
        %s500 = scalar_select %p499, %s21, 0
        %s501 = smul.addr %s500, 2
        %s502 = smul.addr %s501, 4
        %s503 = scalar_lea.vmem %s3, %s502
      $region52: #{multi_loss.1} parent=27 // pred_fallthru
        _
      // Predicated region
      $region53: #{multi_loss.1} parent=27 // pred_check
        %p504 = pneg %p165
      $region54: #{multi_loss.1} parent=27 // pred_check_branch
        %506 = sbr.rel (%p504) target = $region56
      $region55: #{multi_loss.1} parent=27 // pred_region
        %p507 = scmp.lt.s32.totalorder %s21, 0
        %s508 = scalar_select %p507, %s21, 0
        %s509 = smul.addr %s508, 2
        %s510 = smul.addr %s509, 4
        %s511 = scalar_lea.vmem %s4, %s510
      $region56: #{multi_loss.1} parent=27 // pred_fallthru
        _
    $region28: #{multi_loss.1} parent=5 // pred_fallthru
      _
    %p512 = scmp.le.s32.totalorder 2, %s11
    // Predicated region
    $region57: #{multi_loss.1} parent=5 // pred_check
      %p513 = pneg %p512
    $region58: #{multi_loss.1} parent=5 // pred_check_branch
      %515 = sbr.rel (%p513) target = $region60
    $region59: #{multi_loss.1} parent=5 // pred_region
      %s516 = ssub.s32 %s11, 2
    $region60: #{multi_loss.1} parent=5 // pred_fallthru
      _
  $region6: #{multi_loss.1} parent=0 // loop_footer
    %s15 = sadd.s32 1, %s11
  $region7: #{multi_loss.1} parent=0 // loop_footer_branch
    %10 = sbr.rel target = $region3
  $region8: #{multi_loss.1} parent=0 // loop_exit
    _

</llo_original>
